<compile_context>
chip_gen: v5e
topology: v5e:2x2
jax: 0.10.0
libtpu: 0.0.40
codegen_flags: <defaults>
</compile_context>

<pallas_src>
import functools

import jax
import jax.numpy as jnp
from jax import lax
from jax.experimental import pallas as pl
from jax.experimental.pallas import tpu as pltpu

EPS = 1e-5  # PyTorch BatchNorm2d default eps


# ------------------------------ Pallas kernel ------------------------------ #

def _shift_lanes(x, k):
    """out[:, i] = x[:, i-k] for i >= k, 0 for i < k (zero shift-in, safe post-ReLU)."""
    return jnp.concatenate(
        [jnp.zeros((x.shape[0], k), x.dtype), x[:, :x.shape[1] - k]], axis=1)


def _stem_kernel(p_ref, w_ref, b_ref, mw_ref, o_ref, *, w2):
    # p : (1, K, N1) bf16  quadrant-ordered im2col patches (one image)
    # w : (Cout, K)  bf16  BN-folded conv weight (shared)
    # b : (Cout, 1)  f32   BN-folded bias (shared)
    # mw: (1, N2)    f32   0.0 where w2 == 0 else 1.0 (shared)
    # o : (1, Cout, N2) f32 pooled output, spatial dim lane-dense
    n2 = o_ref.shape[2]

    # conv7x7/s2 as a single MXU matmul: (Cout,K) @ (K,N1) -> (Cout,N1), f32 accumulation.
    conv = jnp.dot(w_ref[...], p_ref[0], preferred_element_type=jnp.float32)
    conv = jnp.maximum(conv + b_ref[...], 0.0)          # folded BN bias + ReLU, all >= 0

    # 2x2 space-to-depth quadrants of the conv output (column order produced by the host).
    qa = conv[:, 0 * n2:1 * n2]     # (2h2  , 2w2  )
    qb = conv[:, 1 * n2:2 * n2]     # (2h2  , 2w2+1)
    qc = conv[:, 2 * n2:3 * n2]     # (2h2+1, 2w2  )
    qd = conv[:, 3 * n2:4 * n2]     # (2h2+1, 2w2+1)

    mw = mw_ref[...]                # zero where the left neighbour (w2-1) is out of bounds
    # horizontal 3-tap max over cols {2w2-1, 2w2, 2w2+1}
    h_even = jnp.maximum(qa, jnp.maximum(qb, _shift_lanes(qb, 1) * mw))
    h_odd = jnp.maximum(qc, jnp.maximum(qd, _shift_lanes(qd, 1) * mw))
    # vertical 3-tap max over rows {2h2-1, 2h2, 2h2+1}; row above only exists for h2 > 0
    # (_shift_lanes by W2 already zeroes the h2 == 0 row).
    o_ref[0] = jnp.maximum(h_even, jnp.maximum(h_odd, _shift_lanes(h_odd, w2)))


# ------------------------------ host-side glue ------------------------------ #

def _im2col_quadrants(x, H1, W1):
    """(B,C,H,W) -> (B, C*49, 4*H2*W2): im2col for conv7x7/s2/p3 with the spatial columns
    ordered as 2x2 space-to-depth quadrants of the (H1,W1) conv-output grid.  K layout
    (c, kh, kw) matches the OIHW weight flatten."""
    B, C, _, _ = x.shape
    H2, W2 = H1 // 2, W1 // 2
    xp = jnp.pad(x, ((0, 0), (0, 0), (3, 3), (3, 3)))
    cols = []
    for kh in range(7):
        for kw in range(7):
            cols.append(xp[:, :, kh:kh + 2 * H1:2, kw:kw + 2 * W1:2])   # (B, C, H1, W1)
    p = jnp.stack(cols, axis=2).reshape(B, C * 49, H1, W1)              # K = c*49 + kh*7 + kw
    p = p.reshape(B, C * 49, H2, 2, W2, 2)
    p = jnp.transpose(p, (0, 1, 3, 5, 2, 4))                            # (B, K, dh, dw, H2, W2)
    return p.reshape(B, C * 49, 4 * H2 * W2)                            # col = q*N2 + h2*W2 + w2


def modality_specific_forward(x, params):
    """conv1(7x7, s2, pad 3, no bias) -> bn1(eval stats) -> relu -> maxpool(3x3, s2, pad 1)."""
    B, Cin, H, W = x.shape
    Cout = params['conv_w'].shape[0]
    H1 = (H + 2 * 3 - 7) // 2 + 1
    W1 = (W + 2 * 3 - 7) // 2 + 1
    assert H1 % 2 == 0 and W1 % 2 == 0, "quadrant pooling assumes even conv-output size"
    H2, W2 = H1 // 2, W1 // 2
    N1, N2 = H1 * W1, H2 * W2
    K = Cin * 49

    # im2col patches (bf16 halves HBM->VMEM traffic; f32 accumulation in-kernel)
    patches = _im2col_quadrants(x.astype(jnp.float32), H1, W1).astype(jnp.bfloat16)

    # Fold BatchNorm (eval running stats) into the conv weight / bias.
    scale = params['bn_gamma'] * lax.rsqrt(params['bn_var'] + EPS)               # (Cout,)
    wf = (params['conv_w'].reshape(Cout, K) * scale[:, None]).astype(jnp.bfloat16)
    bf = (params['bn_beta'] - params['bn_mean'] * scale).reshape(Cout, 1).astype(jnp.float32)

    # Horizontal-neighbour validity mask (w2 > 0), shared across images.
    mw = (jnp.arange(N2) % W2 != 0).astype(jnp.float32).reshape(1, N2)

    out = pl.pallas_call(
        functools.partial(_stem_kernel, w2=W2),
        out_shape=jax.ShapeDtypeStruct((B, Cout, N2), jnp.float32),
        grid=(B,),
        in_specs=[
            pl.BlockSpec((1, K, N1), lambda b: (b, 0, 0)),    # per-image patches
            pl.BlockSpec((Cout, K), lambda b: (0, 0)),        # folded weight (shared)
            pl.BlockSpec((Cout, 1), lambda b: (0, 0)),        # folded bias (shared)
            pl.BlockSpec((1, N2), lambda b: (0, 0)),          # w2>0 mask (shared)
        ],
        out_specs=pl.BlockSpec((1, Cout, N2), lambda b: (b, 0, 0)),
        compiler_params=pltpu.CompilerParams(dimension_semantics=("parallel",)),
    )(patches, wf, bf, mw)

    # Output is already NCHW-ordered: pure reshape, no transpose.
    return out.reshape(B, Cout, H2, W2)


# ---------------------------- parameters / reference ------------------------ #

def init_params(key):
    # Mirrors the PyTorch __init__: conv weight ~ N(0, sqrt(2/n)), n = 7*7*64.
    # The original module loads pretrained resnet50 conv1/bn1 from model_zoo (network),
    # which is unavailable here, so BN params / running stats are deterministic random
    # values to fully exercise the folded-BN datapath (forward graph is identical).
    n = 7 * 7 * 64
    kw, kg, kb, km, kv = jax.random.split(key, 5)
    return dict(
        conv_w=jax.random.normal(kw, (64, 3, 7, 7), jnp.float32) * jnp.sqrt(2.0 / n),
        bn_gamma=1.0 + 0.1 * jax.random.normal(kg, (64,), jnp.float32),
        bn_beta=0.1 * jax.random.normal(kb, (64,), jnp.float32),
        bn_mean=0.1 * jax.random.normal(km, (64,), jnp.float32),
        bn_var=0.5 + 0.5 * jnp.abs(jax.random.normal(kv, (64,), jnp.float32)),
    )


def ref_forward(x, p):
    y = lax.conv_general_dilated(x, p['conv_w'], window_strides=(2, 2),
                                 padding=((3, 3), (3, 3)),
                                 dimension_numbers=('NCHW', 'OIHW', 'NCHW'))
    scale = p['bn_gamma'] * lax.rsqrt(p['bn_var'] + EPS)
    shift = p['bn_beta'] - p['bn_mean'] * scale
    y = y * scale[None, :, None, None] + shift[None, :, None, None]
    y = jnp.maximum(y, 0.0)
    y = lax.reduce_window(y, -jnp.inf, lax.max,
                          window_dimensions=(1, 1, 3, 3),
                          window_strides=(1, 1, 2, 2),
                          padding=((0, 0), (0, 0), (1, 1), (1, 1)))
    return y


# ----------------------------------- main ----------------------------------- #

if __name__ == "__main__":
    key = jax.random.PRNGKey(0)
    kx, kp = jax.random.split(key)

    B, H, W = 2, 32, 32
    x = jax.random.normal(kx, (B, 3, H, W), jnp.float32)
    params = init_params(kp)

    forward = jax.jit(modality_specific_forward)
    out = jax.block_until_ready(forward(x, params))
    assert out.shape == (B, 64, 8, 8), out.shape

    ref = ref_forward(x, params)
    max_err = float(jnp.max(jnp.abs(out - ref)))
    # bf16 matmul inputs with f32 accumulation -> loosened tolerance.
    assert max_err < 5e-2, f"mismatch vs reference: {max_err}"

    print("KERNEL_OK")
</pallas_src>

<mosaic_0001>
module attributes {stable_mosaic.version = 11 : i64} {
  func.func @_stem_kernel(%arg0: i32, %arg1: memref<1x147x256xbf16, #tpu.memory_space<vmem>>, %arg2: memref<64x147xbf16, #tpu.memory_space<vmem>>, %arg3: memref<64x1xf32, #tpu.memory_space<vmem>>, %arg4: memref<1x64xf32, #tpu.memory_space<vmem>>, %arg5: memref<1x64x64xf32, #tpu.memory_space<vmem>>) attributes {dimension_semantics = [#tpu.dimension_semantics<parallel>], iteration_bounds = array<i64: 2>, scalar_prefetch = 0 : i64, scratch_operands = 0 : i64, tpu.core_type = #tpu.core_type<tc>, window_params = [{transform_indices = @transform_0, window_bounds = array<i64: 1, 147, 256>}, {pipeline_mode = #tpu.pipeline_mode<synchronous>, transform_indices = @transform_1, window_bounds = array<i64: 64, 147>}, {pipeline_mode = #tpu.pipeline_mode<synchronous>, transform_indices = @transform_2, window_bounds = array<i64: 64, 1>}, {pipeline_mode = #tpu.pipeline_mode<synchronous>, transform_indices = @transform_3, window_bounds = array<i64: 1, 64>}, {transform_indices = @transform_4, window_bounds = array<i64: 1, 64, 64>}]} {
    %c0 = arith.constant 0 : index
    %c0_0 = arith.constant 0 : index
    %0 = vector.load %arg2[%c0, %c0_0] : memref<64x147xbf16, #tpu.memory_space<vmem>>, vector<64x147xbf16>
    %c0_1 = arith.constant 0 : index
    %c0_2 = arith.constant 0 : index
    %c0_3 = arith.constant 0 : index
    %1 = vector.load %arg1[%c0_1, %c0_2, %c0_3] : memref<1x147x256xbf16, #tpu.memory_space<vmem>>, vector<1x147x256xbf16>
    %2 = vector.shape_cast %1 : vector<1x147x256xbf16> to vector<147x256xbf16>
    %cst = arith.constant dense<0.000000e+00> : vector<64x256xf32>
    %3 = tpu.matmul %0, %2, %cst {dimension_numbers = #tpu.dot_dimension_numbers<[1], [0], [0], [1], [0, 0, 1, 1], [], []>} : vector<64x147xbf16>, vector<147x256xbf16>, vector<64x256xf32> -> vector<64x256xf32>
    %c0_4 = arith.constant 0 : index
    %c0_5 = arith.constant 0 : index
    %4 = vector.load %arg3[%c0_4, %c0_5] : memref<64x1xf32, #tpu.memory_space<vmem>>, vector<64x1xf32>
    %5 = vector.broadcast %4 : vector<64x1xf32> to vector<64x256xf32>
    %6 = arith.addf %3, %5 : vector<64x256xf32>
    %cst_6 = arith.constant 0.000000e+00 : f32
    %7 = vector.broadcast %cst_6 : f32 to vector<64x256xf32>
    %8 = arith.maximumf %6, %7 : vector<64x256xf32>
    %9 = vector.extract_strided_slice %8 {offsets = [0, 0], sizes = [64, 64], strides = [1, 1]} : vector<64x256xf32> to vector<64x64xf32>
    %10 = vector.extract_strided_slice %8 {offsets = [0, 64], sizes = [64, 64], strides = [1, 1]} : vector<64x256xf32> to vector<64x64xf32>
    %11 = vector.extract_strided_slice %8 {offsets = [0, 128], sizes = [64, 64], strides = [1, 1]} : vector<64x256xf32> to vector<64x64xf32>
    %12 = vector.extract_strided_slice %8 {offsets = [0, 192], sizes = [64, 64], strides = [1, 1]} : vector<64x256xf32> to vector<64x64xf32>
    %c0_7 = arith.constant 0 : index
    %c0_8 = arith.constant 0 : index
    %13 = vector.load %arg4[%c0_7, %c0_8] : memref<1x64xf32, #tpu.memory_space<vmem>>, vector<1x64xf32>
    %cst_9 = arith.constant 0.000000e+00 : f32
    %14 = vector.broadcast %cst_9 : f32 to vector<64x1xf32>
    %15 = vector.extract_strided_slice %10 {offsets = [0, 0], sizes = [64, 63], strides = [1, 1]} : vector<64x64xf32> to vector<64x63xf32>
    %16 = tpu.concatenate %14, %15 in 1 : vector<64x1xf32>, vector<64x63xf32> -> vector<64x64xf32>
    %17 = vector.broadcast %13 : vector<1x64xf32> to vector<64x64xf32>
    %18 = arith.mulf %16, %17 : vector<64x64xf32>
    %19 = arith.maximumf %10, %18 : vector<64x64xf32>
    %20 = arith.maximumf %9, %19 : vector<64x64xf32>
    %cst_10 = arith.constant 0.000000e+00 : f32
    %21 = vector.broadcast %cst_10 : f32 to vector<64x1xf32>
    %22 = vector.extract_strided_slice %12 {offsets = [0, 0], sizes = [64, 63], strides = [1, 1]} : vector<64x64xf32> to vector<64x63xf32>
    %23 = tpu.concatenate %21, %22 in 1 : vector<64x1xf32>, vector<64x63xf32> -> vector<64x64xf32>
    %24 = vector.broadcast %13 : vector<1x64xf32> to vector<64x64xf32>
    %25 = arith.mulf %23, %24 : vector<64x64xf32>
    %26 = arith.maximumf %12, %25 : vector<64x64xf32>
    %27 = arith.maximumf %11, %26 : vector<64x64xf32>
    %cst_11 = arith.constant 0.000000e+00 : f32
    %28 = vector.broadcast %cst_11 : f32 to vector<64x8xf32>
    %29 = vector.extract_strided_slice %27 {offsets = [0, 0], sizes = [64, 56], strides = [1, 1]} : vector<64x64xf32> to vector<64x56xf32>
    %30 = tpu.concatenate %28, %29 in 1 : vector<64x8xf32>, vector<64x56xf32> -> vector<64x64xf32>
    %31 = arith.maximumf %27, %30 : vector<64x64xf32>
    %32 = arith.maximumf %20, %31 : vector<64x64xf32>
    %c0_12 = arith.constant 0 : index
    %c0_13 = arith.constant 0 : index
    %c0_14 = arith.constant 0 : index
    %33 = vector.load %arg5[%c0_12, %c0_13, %c0_14] : memref<1x64x64xf32, #tpu.memory_space<vmem>>, vector<1x64x64xf32>
    %34 = vector.shape_cast %33 : vector<1x64x64xf32> to vector<64x64xf32>
    %35 = vector.shape_cast %32 : vector<64x64xf32> to vector<1x64x64xf32>
    tpu.vector_store %arg5[%c0_12, %c0_13, %c0_14], %35 {strides = array<i32>} : memref<1x64x64xf32, #tpu.memory_space<vmem>>, vector<1x64x64xf32>,
    return
  }
  func.func @transform_0(%arg0: i32) -> (i32, i32, i32) {
    %c0_i32 = arith.constant 0 : i32
    %c0_i32_0 = arith.constant 0 : i32
    %c0_i32_1 = arith.constant 0 : i32
    return %arg0, %c0_i32, %c0_i32_0 : i32, i32, i32
  }
  func.func @transform_1(%arg0: i32) -> (i32, i32) {
    %c0_i32 = arith.constant 0 : i32
    %c0_i32_0 = arith.constant 0 : i32
    %c0_i32_1 = arith.constant 0 : i32
    return %c0_i32, %c0_i32_0 : i32, i32
  }
  func.func @transform_2(%arg0: i32) -> (i32, i32) {
    %c0_i32 = arith.constant 0 : i32
    %c0_i32_0 = arith.constant 0 : i32
    %c0_i32_1 = arith.constant 0 : i32
    return %c0_i32, %c0_i32_0 : i32, i32
  }
  func.func @transform_3(%arg0: i32) -> (i32, i32) {
    %c0_i32 = arith.constant 0 : i32
    %c0_i32_0 = arith.constant 0 : i32
    %c0_i32_1 = arith.constant 0 : i32
    return %c0_i32, %c0_i32_0 : i32, i32
  }
  func.func @transform_4(%arg0: i32) -> (i32, i32, i32) {
    %c0_i32 = arith.constant 0 : i32
    %c0_i32_0 = arith.constant 0 : i32
    %c0_i32_1 = arith.constant 0 : i32
    return %arg0, %c0_i32, %c0_i32_0 : i32, i32, i32
  }
}

</mosaic_0001>

<llo_original>
// kernel: modality_specific_forward.1
$region0: #{modality_specific_forward.1}
  #allocation0 [shape = 'u32[]', space=smem, size = 0x4, offset = 0x4, fixed_abs, tag = 'smem constant byte address 0x4 - core index']
  #allocation1 [shape = 'u32[72,128]{1,0:T(1,128)}', space=vmem, size = 0x9000, scoped, tag = 'internal scratch']
  %s0 = inlined_call_operand.vmem [shape: bf16[2,147,256], index: 0, kind: input, shape index: {}]
  %s1 = inlined_call_operand.vmem [shape: bf16[64,147], index: 1, kind: input, shape index: {}]
  %s2 = inlined_call_operand.vmem [shape: f32[64,1], index: 2, kind: input, shape index: {}]
  %s3 = inlined_call_operand.vmem [shape: f32[1,64], index: 3, kind: input, shape index: {}]
  %s4 = inlined_call_operand.vmem [shape: f32[2,64,64], index: 4, kind: output, shape index: {}]
  %s5 = sld [smem:[#allocation0]]
  $region49: #{modality_specific_forward.1} parent=0
    _
  %s7 = ssub.s32 1, %s5
  %s8 = scalar_select 0, %s7, %s5
  loop: start=0, step=1, limit=4
  $region2: #{modality_specific_forward.1} parent=0 // loop_pre_header
    _
  $region3: #{modality_specific_forward.1} parent=0 // loop_header
    %s10 = sphi 0, %s14
    %p11 = scmp.ge.s32.totalorder %s10, 4
    %s20 = sphi 0, %s22
    %s23 = sphi 0, %s20
    %s24 = sphi 0, %s23
    %s40 = sphi 0, %s24
    %s44 = sphi 0, %s44
    %s46 = sphi 0, %s44
    %s47 = sphi 0, %s46
    %s61 = sphi 0, %s47
    %s65 = sphi 0, %s65
    %s67 = sphi 0, %s65
    %s68 = sphi 0, %s67
    %s82 = sphi 0, %s68
    %s86 = sphi 0, %s86
    %s88 = sphi 0, %s86
    %s89 = sphi 0, %s88
    %s103 = sphi 0, %s89
    %s109 = sphi 0, %s111
    %s112 = sphi 0, %s109
    %s113 = sphi 0, %s112
    %s129 = sphi 0, %s113
  $region4: #{modality_specific_forward.1} parent=0 // loop_header_branch
    %13 = sbr.rel (%p11) target = $region8
  $region5: #{modality_specific_forward.1} parent=0 // loop_body
    %s15 = ssub.s32 %s10, 1
    %s16 = ssub.s32 %s10, 2
    %s17 = sadd.s32 %s10, 1
    %s18 = ssub.s32 %s10, %s17
    %p19 = scmp.eq.s32.totalorder %s18, 0
    %s21 = sadd.s32 %s20, 1
    %s22 = scalar_select %p19, %s20, %s21
    %p25 = pneg %p19
    %p26 = scmp.eq.s32.totalorder %s10, 1
    %p27 = por %p25, %p26
    %p28 = scmp.ne.s32.totalorder %s20, %s23
    %p29 = scmp.eq.s32.totalorder %s10, 0
    %p30 = por %p28, %p29
    %p31 = scmp.ne.s32.totalorder %s20, %s23
    %p32 = scmp.eq.s32.totalorder %s15, 1
    %p33 = por %p31, %p32
    %p34 = scmp.ne.s32.totalorder %s23, %s24
    %p35 = scmp.eq.s32.totalorder %s15, 0
    %p36 = por %p34, %p35
    %p37 = scmp.ne.s32.totalorder %s23, %s24
    %p38 = scmp.eq.s32.totalorder %s16, 1
    %p39 = por %p37, %p38
    %p41 = scmp.ne.s32.totalorder %s24, %s40
    %p42 = scmp.eq.s32.totalorder %s16, 0
    %p43 = por %p41, %p42
    %s45 = sadd.s32 %s44, 1
    %p48 = scmp.eq.s32.totalorder %s10, 1
    %p49 = scmp.ne.s32.totalorder %s44, %s46
    %p50 = scmp.eq.s32.totalorder %s10, 0
    %p51 = por %p49, %p50
    %p52 = scmp.ne.s32.totalorder %s44, %s46
    %p53 = scmp.eq.s32.totalorder %s15, 1
    %p54 = por %p52, %p53
    %p55 = scmp.ne.s32.totalorder %s46, %s47
    %p56 = scmp.eq.s32.totalorder %s15, 0
    %p57 = por %p55, %p56
    %p58 = scmp.ne.s32.totalorder %s46, %s47
    %p59 = scmp.eq.s32.totalorder %s16, 1
    %p60 = por %p58, %p59
    %p62 = scmp.ne.s32.totalorder %s47, %s61
    %p63 = scmp.eq.s32.totalorder %s16, 0
    %p64 = por %p62, %p63
    %s66 = sadd.s32 %s65, 1
    %p69 = scmp.eq.s32.totalorder %s10, 1
    %p70 = scmp.ne.s32.totalorder %s65, %s67
    %p71 = scmp.eq.s32.totalorder %s10, 0
    %p72 = por %p70, %p71
    %p73 = scmp.ne.s32.totalorder %s65, %s67
    %p74 = scmp.eq.s32.totalorder %s15, 1
    %p75 = por %p73, %p74
    %p76 = scmp.ne.s32.totalorder %s67, %s68
    %p77 = scmp.eq.s32.totalorder %s15, 0
    %p78 = por %p76, %p77
    %p79 = scmp.ne.s32.totalorder %s67, %s68
    %p80 = scmp.eq.s32.totalorder %s16, 1
    %p81 = por %p79, %p80
    %p83 = scmp.ne.s32.totalorder %s68, %s82
    %p84 = scmp.eq.s32.totalorder %s16, 0
    %p85 = por %p83, %p84
    %s87 = sadd.s32 %s86, 1
    %p90 = scmp.eq.s32.totalorder %s10, 1
    %p91 = scmp.ne.s32.totalorder %s86, %s88
    %p92 = scmp.eq.s32.totalorder %s10, 0
    %p93 = por %p91, %p92
    %p94 = scmp.ne.s32.totalorder %s86, %s88
    %p95 = scmp.eq.s32.totalorder %s15, 1
    %p96 = por %p94, %p95
    %p97 = scmp.ne.s32.totalorder %s88, %s89
    %p98 = scmp.eq.s32.totalorder %s15, 0
    %p99 = por %p97, %p98
    %p100 = scmp.ne.s32.totalorder %s88, %s89
    %p101 = scmp.eq.s32.totalorder %s16, 1
    %p102 = por %p100, %p101
    %p104 = scmp.ne.s32.totalorder %s89, %s103
    %p105 = scmp.eq.s32.totalorder %s16, 0
    %p106 = por %p104, %p105
    %s107 = ssub.s32 %s10, %s17
    %p108 = scmp.eq.s32.totalorder %s107, 0
    %s110 = sadd.s32 %s109, 1
    %s111 = scalar_select %p108, %s109, %s110
    %p114 = pneg %p108
    %p115 = scmp.eq.s32.totalorder %s10, 1
    %p116 = por %p114, %p115
    %p117 = scmp.ne.s32.totalorder %s109, %s112
    %p118 = scmp.eq.s32.totalorder %s10, 0
    %p119 = por %p117, %p118
    %p120 = scmp.ne.s32.totalorder %s109, %s112
    %p121 = scmp.eq.s32.totalorder %s15, 1
    %p122 = por %p120, %p121
    %p123 = scmp.ne.s32.totalorder %s112, %s113
    %p124 = scmp.eq.s32.totalorder %s15, 0
    %p125 = por %p123, %p124
    %p126 = scmp.ne.s32.totalorder %s112, %s113
    %p127 = scmp.eq.s32.totalorder %s16, 1
    %p128 = por %p126, %p127
    %p130 = scmp.ne.s32.totalorder %s113, %s129
    %p131 = scmp.eq.s32.totalorder %s16, 0
    %p132 = por %p130, %p131
    %p133 = scmp.le.s32.totalorder 1, %s10
    %p134 = scmp.lt.s32.totalorder %s10, 3
    %p135 = pnand %p133, %p134
    %p136 = pneg %p135
    // Predicated region
    $region9: #{modality_specific_forward.1} parent=5 // pred_check
      _
    $region10: #{modality_specific_forward.1} parent=5 // pred_check_branch
      %138 = sbr.rel (%p135) target = $region12
    $region11: #{modality_specific_forward.1} parent=5 // pred_region
      %s139 = ssub.s32 %s10, 1
      // Predicated region
      $region13: #{modality_specific_forward.1} parent=11 // pred_check
        %p140 = pneg %p57
      $region14: #{modality_specific_forward.1} parent=11 // pred_check_branch
        %142 = sbr.rel (%p140) target = $region16
      $region15: #{modality_specific_forward.1} parent=11 // pred_region
        _
      $region16: #{modality_specific_forward.1} parent=11 // pred_fallthru
        _
      // Predicated region
      $region17: #{modality_specific_forward.1} parent=11 // pred_check
        %p143 = pneg %p78
      $region18: #{modality_specific_forward.1} parent=11 // pred_check_branch
        %145 = sbr.rel (%p143) target = $region20
      $region19: #{modality_specific_forward.1} parent=11 // pred_region
        _
      $region20: #{modality_specific_forward.1} parent=11 // pred_fallthru
        _
      // Predicated region
      $region21: #{modality_specific_forward.1} parent=11 // pred_check
        %p146 = pneg %p99
      $region22: #{modality_specific_forward.1} parent=11 // pred_check_branch
        %148 = sbr.rel (%p146) target = $region24
      $region23: #{modality_specific_forward.1} parent=11 // pred_region
        _
      $region24: #{modality_specific_forward.1} parent=11 // pred_fallthru
        _
    $region12: #{modality_specific_forward.1} parent=5 // pred_fallthru
      _
    %p149 = scmp.lt.s32.totalorder %s10, 2
    // Predicated region
    $region25: #{modality_specific_forward.1} parent=5 // pred_check
      %p150 = pneg %p149
    $region26: #{modality_specific_forward.1} parent=5 // pred_check_branch
      %152 = sbr.rel (%p150) target = $region28
    $region27: #{modality_specific_forward.1} parent=5 // pred_region
      // Predicated region
      $region29: #{modality_specific_forward.1} parent=27 // pred_check
        %p153 = pneg %p30
      $region30: #{modality_specific_forward.1} parent=27 // pred_check_branch
        %155 = sbr.rel (%p153) target = $region32
      $region31: #{modality_specific_forward.1} parent=27 // pred_region
        %p156 = scmp.lt.s32.totalorder %s10, 1
        %s157 = scalar_select %p156, %s10, 1
        %s158 = smul.addr %s157, 38
        %s159 = smul.addr %s158, 4
        %s160 = scalar_lea.vmem %s0, %s159
      $region32: #{modality_specific_forward.1} parent=27 // pred_fallthru
        _
    $region28: #{modality_specific_forward.1} parent=5 // pred_fallthru
      _
    %p161 = scmp.le.s32.totalorder 1, %s10
    %p162 = scmp.lt.s32.totalorder %s10, 3
    %p163 = pnand %p161, %p162
    %p164 = pneg %p163
    // Predicated region
    $region33: #{modality_specific_forward.1} parent=5 // pred_check
      _
    $region34: #{modality_specific_forward.1} parent=5 // pred_check_branch
      %166 = sbr.rel (%p163) target = $region36
    $region35: #{modality_specific_forward.1} parent=5 // pred_region
      %s167 = ssub.s32 %s10, 1
      %p168 = scmp.lt.s32.totalorder %s15, 1
      %s169 = scalar_select %p168, %s15, 1
      %s170 = smul.addr %s169, 38
      %s171 = smul.addr %s170, 4
      %s172 = scalar_lea.vmem %s0, %s171
      %p173 = pneg %p36
      %p174 = pneg %p33
      %p175 = pneg %p57
      %p176 = pneg %p54
      %p177 = pneg %p78
      %p178 = pneg %p75
      %p179 = pneg %p99
      %p180 = pneg %p96
      %p181 = pneg %p125
      %p182 = pneg %p122
      %p183 = scmp.lt.s32.totalorder %s15, 1
      %s184 = scalar_select %p183, %s15, 1
      %s185 = smul.addr %s184, 8
      %s186 = smul.addr %s185, 8
      %s187 = scalar_lea.vmem %s4, %s186
      %p188 = scmp.lt.s32.totalorder %s15, 1
      %s189 = scalar_select %p188, %s15, 1
      %s190 = smul.addr %s189, 38
      %s191 = smul.addr %s190, 4
      %s192 = scalar_lea.vmem %s0, %s191
      %p193 = scmp.lt.s32.totalorder %s15, 1
      %s194 = scalar_select %p193, %s15, 1
      %s195 = smul.addr %s194, 8
      %s196 = smul.addr %s195, 8
      %s197 = scalar_lea.vmem %s4, %s196
      %v199 = vld [vmem:[%s1] sm:$0xff]
      %v200 = vld [vmem:[%s1 + $0x8] sm:$0xff]
      %v201 = vld [vmem:[%s1 + $0x10] sm:$0xff]
      %v202 = vld [vmem:[%s1 + $0x18] sm:$0xff]
      %v203 = vld [vmem:[%s1 + $0x20] sm:$0xff]
      %v204 = vld [vmem:[%s1 + $0x28] sm:$0xff]
      %v205 = vld [vmem:[%s1 + $0x30] sm:$0xff]
      %v206 = vld [vmem:[%s1 + $0x38] sm:$0xff]
      %v207 = vld [vmem:[%s192] sm:$0xff]
      %v208 = vld [vmem:[%s192 + $0x8] sm:$0xff]
      %v209 = vld [vmem:[%s192 + $0x10] sm:$0xff]
      %v210 = vld [vmem:[%s192 + $0x18] sm:$0xff]
      %v211 = vld [vmem:[%s192 + $0x20] sm:$0xff]
      %v212 = vld [vmem:[%s192 + $0x28] sm:$0xff]
      %v213 = vld [vmem:[%s192 + $0x30] sm:$0xff]
      %v214 = vld [vmem:[%s192 + $0x38] sm:$0xff]
      %v215 = vld [vmem:[%s192 + $0x40] sm:$0xff]
      %v216 = vld [vmem:[%s192 + $0x48] sm:$0xff]
      %v217 = vld [vmem:[%s192 + $0x50] sm:$0xff]
      %v218 = vld [vmem:[%s192 + $0x58] sm:$0xff]
      %v219 = vld [vmem:[%s192 + $0x60] sm:$0xff]
      %v220 = vld [vmem:[%s192 + $0x68] sm:$0xff]
      %v221 = vld [vmem:[%s192 + $0x70] sm:$0xff]
      %v222 = vld [vmem:[%s192 + $0x78] sm:$0xff]
      %v223 = vld [vmem:[%s192 + $0x80] sm:$0xff]
      %v224 = vld [vmem:[%s192 + $0x88] sm:$0xff]
      %v225 = vld [vmem:[%s192 + $0x90] sm:$0x33]
      %v226 = vld [vmem:[%s2] sm:$0xff]
      %v227 = vld [vmem:[%s2 + $0x8] sm:$0xff]
      %v228 = vld [vmem:[%s2 + $0x10] sm:$0xff]
      %v229 = vld [vmem:[%s2 + $0x18] sm:$0xff]
      %v230 = vld [vmem:[%s2 + $0x20] sm:$0xff]
      %v231 = vld [vmem:[%s2 + $0x28] sm:$0xff]
      %v232 = vld [vmem:[%s2 + $0x30] sm:$0xff]
      %v233 = vld [vmem:[%s2 + $0x38] sm:$0xff]
      %235 = vset.pattern.permute.xlu0 0
      %236 = vperm.xlu0 %235, %v226
      %v237 = vpop.permute.xlu0 %236
      %240 = vset.pattern.permute.xlu0 0
      %241 = vperm.xlu0 %240, %v227
      %v242 = vpop.permute.xlu0 %241
      %245 = vset.pattern.permute.xlu0 0
      %246 = vperm.xlu0 %245, %v228
      %v247 = vpop.permute.xlu0 %246
      %250 = vset.pattern.permute.xlu0 0
      %251 = vperm.xlu0 %250, %v229
      %v252 = vpop.permute.xlu0 %251
      %255 = vset.pattern.permute.xlu0 0
      %256 = vperm.xlu0 %255, %v230
      %v257 = vpop.permute.xlu0 %256
      %260 = vset.pattern.permute.xlu0 0
      %261 = vperm.xlu0 %260, %v231
      %v262 = vpop.permute.xlu0 %261
      %265 = vset.pattern.permute.xlu0 0
      %266 = vperm.xlu0 %265, %v232
      %v267 = vpop.permute.xlu0 %266
      %270 = vset.pattern.permute.xlu0 0
      %271 = vperm.xlu0 %270, %v233
      %v272 = vpop.permute.xlu0 %271
      %v282 = vunpack.c.l.b16 %v199
      %v283 = vunpack.c.h.b16 %v199
      %v284 = vunpack.c.l.b16 %v200
      %v285 = vunpack.c.h.b16 %v200
      %v286 = vunpack.c.l.b16 %v201
      %v287 = vunpack.c.h.b16 %v201
      %v288 = vunpack.c.l.b16 %v202
      %v289 = vunpack.c.h.b16 %v202
      %v290 = vunpack.c.l.b16 %v203
      %v291 = vunpack.c.h.b16 %v203
      %v292 = vunpack.c.l.b16 %v204
      %v293 = vunpack.c.h.b16 %v204
      %v294 = vunpack.c.l.b16 %v205
      %v295 = vunpack.c.h.b16 %v205
      %v296 = vunpack.c.l.b16 %v206
      %v297 = vunpack.c.h.b16 %v206
      %v298 = vpack.c.b16 %v284, %v282
      %v299 = vpack.c.b16 %v285, %v283
      %v300 = vpack.c.b16 %v288, %v286
      %v301 = vpack.c.b16 %v289, %v287
      %v302 = vpack.c.b16 %v292, %v290
      %v303 = vpack.c.b16 %v293, %v291
      %v304 = vpack.c.b16 %v296, %v294
      %v305 = vpack.c.b16 %v297, %v295
      %v329 = vunpack.c.l.b16 %v207
      %v330 = vunpack.c.h.b16 %v207
      %v331 = vunpack.c.l.b16 %v208
      %v332 = vunpack.c.h.b16 %v208
      %v333 = vunpack.c.l.b16 %v209
      %v334 = vunpack.c.h.b16 %v209
      %v335 = vunpack.c.l.b16 %v210
      %v336 = vunpack.c.h.b16 %v210
      %v337 = vunpack.c.l.b16 %v211
      %v338 = vunpack.c.h.b16 %v211
      %v339 = vunpack.c.l.b16 %v212
      %v340 = vunpack.c.h.b16 %v212
      %v341 = vunpack.c.l.b16 %v213
      %v342 = vunpack.c.h.b16 %v213
      %v343 = vunpack.c.l.b16 %v214
      %v344 = vunpack.c.h.b16 %v214
      %v345 = vunpack.c.l.b16 %v215
      %v346 = vunpack.c.h.b16 %v215
      %v347 = vunpack.c.l.b16 %v216
      %v348 = vunpack.c.h.b16 %v216
      %v349 = vunpack.c.l.b16 %v217
      %v350 = vunpack.c.h.b16 %v217
      %v351 = vunpack.c.l.b16 %v218
      %v352 = vunpack.c.h.b16 %v218
      %v353 = vunpack.c.l.b16 %v219
      %v354 = vunpack.c.h.b16 %v219
      %v355 = vunpack.c.l.b16 %v220
      %v356 = vunpack.c.h.b16 %v220
      %v357 = vunpack.c.l.b16 %v221
      %v358 = vunpack.c.h.b16 %v221
      %v359 = vunpack.c.l.b16 %v222
      %v360 = vunpack.c.h.b16 %v222
      %v361 = vunpack.c.l.b16 %v223
      %v362 = vunpack.c.h.b16 %v223
      %v363 = vunpack.c.l.b16 %v224
      %v364 = vunpack.c.h.b16 %v224
      %v365 = vunpack.c.l.b16 %v225
      %v366 = vunpack.c.h.b16 %v225
      %v367 = vpack.c.b16 %v331, %v329
      %v368 = vpack.c.b16 %v332, %v330
      %v369 = vpack.c.b16 %v335, %v333
      %v370 = vpack.c.b16 %v336, %v334
      %v371 = vpack.c.b16 %v339, %v337
      %v372 = vpack.c.b16 %v340, %v338
      %v373 = vpack.c.b16 %v343, %v341
      %v374 = vpack.c.b16 %v344, %v342
      %v375 = vpack.c.b16 %v347, %v345
      %v376 = vpack.c.b16 %v348, %v346
      %v377 = vpack.c.b16 %v351, %v349
      %v378 = vpack.c.b16 %v352, %v350
      %v379 = vpack.c.b16 %v355, %v353
      %v380 = vpack.c.b16 %v356, %v354
      %v381 = vpack.c.b16 %v359, %v357
      %v382 = vpack.c.b16 %v360, %v358
      %v383 = vpack.c.b16 %v363, %v361
      %v384 = vpack.c.b16 %v364, %v362
      %v385 = vpack.c.b16 %v365, %v365
      %v386 = vpack.c.b16 %v366, %v366
      %vm405 = vcmask 154624
      %v407 = vsel %vm405, %v299, 0
      %v410 = vsel %vm405, %v301, 0
      %v413 = vsel %vm405, %v303, 0
      %v416 = vsel %vm405, %v305, 0
      %vm418 = vcmask 1040384
      %vm419 = vcmask 1041408
      %v420 = vsel %vm418, 4294967295, 65535
      %v421 = vsel %vm419, %v420, 0
      %v423 = vand.u32 %v385, %v421
      %v426 = vand.u32 %v386, %v421
      %428 = vmatpush.bf16.msra.mxu0 %v381
      %429 = vmatpush.bf16.msra.mxu0 %v379
      %430 = vmatpush.bf16.msra.mxu0 %v377
      %431 = vmatpush.bf16.msra.mxu0 %v375
      %432 = vmatpush.bf16.msra.mxu0 %v373
      %433 = vmatpush.bf16.msra.mxu0 %v371
      %434 = vmatpush.bf16.msra.mxu0 %v369
      %435 = vmatpush.bf16.msra.mxu0 %v367
      %436 = vmatmul.bf16.gmra.mxu0 %v298
      %v437 = vpop.f32.mrf.mxu0
      %v438 = vadd.f32 %v237, %v437
      %v439 = vpop.f32.mrf.mxu0
      %v440 = vadd.f32 %v242, %v439
      %441 = vmatmul.bf16.gmra.mxu0 %v300
      %v442 = vpop.f32.mrf.mxu0
      %v443 = vadd.f32 %v247, %v442
      %v444 = vpop.f32.mrf.mxu0
      %v445 = vadd.f32 %v252, %v444
      %446 = vmatmul.bf16.gmra.mxu0 %v302
      %v447 = vpop.f32.mrf.mxu0
      %v448 = vadd.f32 %v257, %v447
      %v449 = vpop.f32.mrf.mxu0
      %v450 = vadd.f32 %v262, %v449
      %451 = vmatmul.bf16.gmra.mxu0 %v304
      %v452 = vpop.f32.mrf.mxu0
      %v453 = vadd.f32 %v267, %v452
      %v454 = vpop.f32.mrf.mxu0
      %v455 = vadd.f32 %v272, %v454
      %456 = vdwg.mxu0
      %457 = vmatpush.bf16.msra.mxu0 0
      %458 = vmatpush.bf16.msra.mxu0 0
      %459 = vmatpush.bf16.msra.mxu0 0
      %460 = vmatpush.bf16.msra.mxu0 0
      %461 = vmatpush.bf16.msra.mxu0 0
      %462 = vmatpush.bf16.msra.mxu0 0
      %463 = vmatpush.bf16.msra.mxu0 %v423
      %464 = vmatpush.bf16.msra.mxu0 %v383
      %465 = vmatmul.bf16.gmra.mxu0 %v407
      %v466 = vpop.f32.mrf.mxu0
      %v467 = vadd.f32 %v438, %v466
      %v468 = vpop.f32.mrf.mxu0
      %v469 = vadd.f32 %v440, %v468
      %470 = vmatmul.bf16.gmra.mxu0 %v410
      %v471 = vpop.f32.mrf.mxu0
      %v472 = vadd.f32 %v443, %v471
      %v473 = vpop.f32.mrf.mxu0
      %v474 = vadd.f32 %v445, %v473
      %475 = vmatmul.bf16.gmra.mxu0 %v413
      %v476 = vpop.f32.mrf.mxu0
      %v477 = vadd.f32 %v448, %v476
      %v478 = vpop.f32.mrf.mxu0
      %v479 = vadd.f32 %v450, %v478
      %480 = vmatmul.bf16.gmra.mxu0 %v416
      %v481 = vpop.f32.mrf.mxu0
      %v482 = vadd.f32 %v453, %v481
      %v483 = vpop.f32.mrf.mxu0
      %v484 = vadd.f32 %v455, %v483
      %485 = vdwg.mxu0
      %486 = vmatpush.bf16.msra.mxu0 %v382
      %487 = vmatpush.bf16.msra.mxu0 %v380
      %488 = vmatpush.bf16.msra.mxu0 %v378
      %489 = vmatpush.bf16.msra.mxu0 %v376
      %490 = vmatpush.bf16.msra.mxu0 %v374
      %491 = vmatpush.bf16.msra.mxu0 %v372
      %492 = vmatpush.bf16.msra.mxu0 %v370
      %493 = vmatpush.bf16.msra.mxu0 %v368
      %494 = vmatmul.bf16.gmra.mxu0 %v298
      %v495 = vpop.f32.mrf.mxu0
      %v496 = vadd.f32 %v237, %v495
      %v497 = vpop.f32.mrf.mxu0
      %v498 = vadd.f32 %v242, %v497
      %499 = vmatmul.bf16.gmra.mxu0 %v300
      %v500 = vpop.f32.mrf.mxu0
      %v501 = vadd.f32 %v247, %v500
      %v502 = vpop.f32.mrf.mxu0
      %v503 = vadd.f32 %v252, %v502
      %504 = vmatmul.bf16.gmra.mxu0 %v302
      %v505 = vpop.f32.mrf.mxu0
      %v506 = vadd.f32 %v257, %v505
      %v507 = vpop.f32.mrf.mxu0
      %v508 = vadd.f32 %v262, %v507
      %509 = vmatmul.bf16.gmra.mxu0 %v304
      %v510 = vpop.f32.mrf.mxu0
      %v511 = vadd.f32 %v267, %v510
      %v512 = vpop.f32.mrf.mxu0
      %v513 = vadd.f32 %v272, %v512
      %514 = vdwg.mxu0
      %515 = vmatpush.bf16.msra.mxu0 0
      %516 = vmatpush.bf16.msra.mxu0 0
      %517 = vmatpush.bf16.msra.mxu0 0
      %518 = vmatpush.bf16.msra.mxu0 0
      %519 = vmatpush.bf16.msra.mxu0 0
      %520 = vmatpush.bf16.msra.mxu0 0
      %521 = vmatpush.bf16.msra.mxu0 %v426
      %522 = vmatpush.bf16.msra.mxu0 %v384
      %523 = vmatmul.bf16.gmra.mxu0 %v407
      %v524 = vpop.f32.mrf.mxu0
      %v525 = vadd.f32 %v496, %v524
      %v526 = vpop.f32.mrf.mxu0
      %v527 = vadd.f32 %v498, %v526
      %528 = vmatmul.bf16.gmra.mxu0 %v410
      %v529 = vpop.f32.mrf.mxu0
      %v530 = vadd.f32 %v501, %v529
      %v531 = vpop.f32.mrf.mxu0
      %v532 = vadd.f32 %v503, %v531
      %533 = vmatmul.bf16.gmra.mxu0 %v413
      %v534 = vpop.f32.mrf.mxu0
      %v535 = vadd.f32 %v506, %v534
      %v536 = vpop.f32.mrf.mxu0
      %v537 = vadd.f32 %v508, %v536
      %538 = vmatmul.bf16.gmra.mxu0 %v416
      %v539 = vpop.f32.mrf.mxu0
      %v540 = vadd.f32 %v511, %v539
      %v541 = vpop.f32.mrf.mxu0
      %v542 = vadd.f32 %v513, %v541
      %543 = vdwg.mxu0
      %v544 = vmax.f32 %v467, 0.0
      %v545 = vmax.f32 %v525, 0.0
      %v546 = vmax.f32 %v469, 0.0
      %v547 = vmax.f32 %v527, 0.0
      %v548 = vmax.f32 %v472, 0.0
      %v549 = vmax.f32 %v530, 0.0
      %v550 = vmax.f32 %v474, 0.0
      %v551 = vmax.f32 %v532, 0.0
      %v552 = vmax.f32 %v477, 0.0
      %v553 = vmax.f32 %v535, 0.0
      %v554 = vmax.f32 %v479, 0.0
      %v555 = vmax.f32 %v537, 0.0
      %v556 = vmax.f32 %v482, 0.0
      %v557 = vmax.f32 %v540, 0.0
      %v558 = vmax.f32 %v484, 0.0
      %v559 = vmax.f32 %v542, 0.0
      %v560 = vld [vmem:[%s3] sm:$0x1]
      %569 = vrot.lane.b32.xlu0 %v544, 65
      %v570 = vpop.permute.xlu0 %569
      %571 = vrot.lane.b32.xlu0 %v546, 65
      %v572 = vpop.permute.xlu0 %571
      %573 = vrot.lane.b32.xlu0 %v548, 65
      %v574 = vpop.permute.xlu0 %573
      %575 = vrot.lane.b32.xlu0 %v550, 65
      %v576 = vpop.permute.xlu0 %575
      %577 = vrot.lane.b32.xlu0 %v552, 65
      %v578 = vpop.permute.xlu0 %577
      %579 = vrot.lane.b32.xlu0 %v554, 65
      %v580 = vpop.permute.xlu0 %579
      %581 = vrot.lane.b32.xlu0 %v556, 65
      %v582 = vpop.permute.xlu0 %581
      %583 = vrot.lane.b32.xlu0 %v558, 65
      %v584 = vpop.permute.xlu0 %583
      %vm593 = vcmask 7168
      %v594 = vsel %vm593, 0.0, %v570
      %v595 = vsel %vm593, 0.0, %v572
      %v596 = vsel %vm593, 0.0, %v574
      %v597 = vsel %vm593, 0.0, %v576
      %v598 = vsel %vm593, 0.0, %v578
      %v599 = vsel %vm593, 0.0, %v580
      %v600 = vsel %vm593, 0.0, %v582
      %v601 = vsel %vm593, 0.0, %v584
      %v603 = vperm.slane %v560, 0
      %v605 = vmul.f32 %v594, %v603
      %v606 = vmul.f32 %v595, %v603
      %v607 = vmul.f32 %v596, %v603
      %v608 = vmul.f32 %v597, %v603
      %v609 = vmul.f32 %v598, %v603
      %v610 = vmul.f32 %v599, %v603
      %v611 = vmul.f32 %v600, %v603
      %v612 = vmul.f32 %v601, %v603
      %621 = vrot.lane.b32.xlu0 %v605, 64
      %v622 = vpop.permute.xlu0 %621
      %623 = vrot.lane.b32.xlu0 %v606, 64
      %v624 = vpop.permute.xlu0 %623
      %625 = vrot.lane.b32.xlu0 %v607, 64
      %v626 = vpop.permute.xlu0 %625
      %627 = vrot.lane.b32.xlu0 %v608, 64
      %v628 = vpop.permute.xlu0 %627
      %629 = vrot.lane.b32.xlu0 %v609, 64
      %v630 = vpop.permute.xlu0 %629
      %631 = vrot.lane.b32.xlu0 %v610, 64
      %v632 = vpop.permute.xlu0 %631
      %633 = vrot.lane.b32.xlu0 %v611, 64
      %v634 = vpop.permute.xlu0 %633
      %635 = vrot.lane.b32.xlu0 %v612, 64
      %v636 = vpop.permute.xlu0 %635
      %v645 = vmax.f32 %v544, %v622
      %v646 = vmax.f32 %v546, %v624
      %v647 = vmax.f32 %v548, %v626
      %v648 = vmax.f32 %v550, %v628
      %v649 = vmax.f32 %v552, %v630
      %v650 = vmax.f32 %v554, %v632
      %v651 = vmax.f32 %v556, %v634
      %v652 = vmax.f32 %v558, %v636
      %661 = vrot.lane.b32.xlu0 %v645, 64
      %v662 = vpop.permute.xlu0 %661
      %663 = vrot.lane.b32.xlu0 %v646, 64
      %v664 = vpop.permute.xlu0 %663
      %665 = vrot.lane.b32.xlu0 %v647, 64
      %v666 = vpop.permute.xlu0 %665
      %667 = vrot.lane.b32.xlu0 %v648, 64
      %v668 = vpop.permute.xlu0 %667
      %669 = vrot.lane.b32.xlu0 %v649, 64
      %v670 = vpop.permute.xlu0 %669
      %671 = vrot.lane.b32.xlu0 %v650, 64
      %v672 = vpop.permute.xlu0 %671
      %673 = vrot.lane.b32.xlu0 %v651, 64
      %v674 = vpop.permute.xlu0 %673
      %675 = vrot.lane.b32.xlu0 %v652, 64
      %v676 = vpop.permute.xlu0 %675
      %v685 = vmax.f32 %v544, %v662
      %v686 = vmax.f32 %v546, %v664
      %v687 = vmax.f32 %v548, %v666
      %v688 = vmax.f32 %v550, %v668
      %v689 = vmax.f32 %v552, %v670
      %v690 = vmax.f32 %v554, %v672
      %v691 = vmax.f32 %v556, %v674
      %v692 = vmax.f32 %v558, %v676
      %701 = vrot.lane.b32.xlu0 %v545, 65
      %v702 = vpop.permute.xlu0 %701
      %703 = vrot.lane.b32.xlu0 %v547, 65
      %v704 = vpop.permute.xlu0 %703
      %705 = vrot.lane.b32.xlu0 %v549, 65
      %v706 = vpop.permute.xlu0 %705
      %707 = vrot.lane.b32.xlu0 %v551, 65
      %v708 = vpop.permute.xlu0 %707
      %709 = vrot.lane.b32.xlu0 %v553, 65
      %v710 = vpop.permute.xlu0 %709
      %711 = vrot.lane.b32.xlu0 %v555, 65
      %v712 = vpop.permute.xlu0 %711
      %713 = vrot.lane.b32.xlu0 %v557, 65
      %v714 = vpop.permute.xlu0 %713
      %715 = vrot.lane.b32.xlu0 %v559, 65
      %v716 = vpop.permute.xlu0 %715
      %v725 = vsel %vm593, 0.0, %v702
      %v726 = vsel %vm593, 0.0, %v704
      %v727 = vsel %vm593, 0.0, %v706
      %v728 = vsel %vm593, 0.0, %v708
      %v729 = vsel %vm593, 0.0, %v710
      %v730 = vsel %vm593, 0.0, %v712
      %v731 = vsel %vm593, 0.0, %v714
      %v732 = vsel %vm593, 0.0, %v716
      %v733 = vmul.f32 %v725, %v603
      %v734 = vmul.f32 %v726, %v603
      %v735 = vmul.f32 %v727, %v603
      %v736 = vmul.f32 %v728, %v603
      %v737 = vmul.f32 %v729, %v603
      %v738 = vmul.f32 %v730, %v603
      %v739 = vmul.f32 %v731, %v603
      %v740 = vmul.f32 %v732, %v603
      %749 = vrot.lane.b32.xlu0 %v733, 64
      %v750 = vpop.permute.xlu0 %749
      %751 = vrot.lane.b32.xlu0 %v734, 64
      %v752 = vpop.permute.xlu0 %751
      %753 = vrot.lane.b32.xlu0 %v735, 64
      %v754 = vpop.permute.xlu0 %753
      %755 = vrot.lane.b32.xlu0 %v736, 64
      %v756 = vpop.permute.xlu0 %755
      %757 = vrot.lane.b32.xlu0 %v737, 64
      %v758 = vpop.permute.xlu0 %757
      %759 = vrot.lane.b32.xlu0 %v738, 64
      %v760 = vpop.permute.xlu0 %759
      %761 = vrot.lane.b32.xlu0 %v739, 64
      %v762 = vpop.permute.xlu0 %761
      %763 = vrot.lane.b32.xlu0 %v740, 64
      %v764 = vpop.permute.xlu0 %763
      %v773 = vmax.f32 %v545, %v750
      %v774 = vmax.f32 %v547, %v752
      %v775 = vmax.f32 %v549, %v754
      %v776 = vmax.f32 %v551, %v756
      %v777 = vmax.f32 %v553, %v758
      %v778 = vmax.f32 %v555, %v760
      %v779 = vmax.f32 %v557, %v762
      %v780 = vmax.f32 %v559, %v764
      %789 = vrot.lane.b32.xlu0 %v773, 64
      %v790 = vpop.permute.xlu0 %789
      %791 = vrot.lane.b32.xlu0 %v774, 64
      %v792 = vpop.permute.xlu0 %791
      %793 = vrot.lane.b32.xlu0 %v775, 64
      %v794 = vpop.permute.xlu0 %793
      %795 = vrot.lane.b32.xlu0 %v776, 64
      %v796 = vpop.permute.xlu0 %795
      %797 = vrot.lane.b32.xlu0 %v777, 64
      %v798 = vpop.permute.xlu0 %797
      %799 = vrot.lane.b32.xlu0 %v778, 64
      %v800 = vpop.permute.xlu0 %799
      %801 = vrot.lane.b32.xlu0 %v779, 64
      %v802 = vpop.permute.xlu0 %801
      %803 = vrot.lane.b32.xlu0 %v780, 64
      %v804 = vpop.permute.xlu0 %803
      %v813 = vmax.f32 %v545, %v790
      %v814 = vmax.f32 %v547, %v792
      %v815 = vmax.f32 %v549, %v794
      %v816 = vmax.f32 %v551, %v796
      %v817 = vmax.f32 %v553, %v798
      %v818 = vmax.f32 %v555, %v800
      %v819 = vmax.f32 %v557, %v802
      %v820 = vmax.f32 %v559, %v804
      %829 = vrot.lane.b32.xlu0 %v813, 8
      %v830 = vpop.permute.xlu0 %829
      %831 = vrot.lane.b32.xlu0 %v814, 8
      %v832 = vpop.permute.xlu0 %831
      %833 = vrot.lane.b32.xlu0 %v815, 8
      %v834 = vpop.permute.xlu0 %833
      %835 = vrot.lane.b32.xlu0 %v816, 8
      %v836 = vpop.permute.xlu0 %835
      %837 = vrot.lane.b32.xlu0 %v817, 8
      %v838 = vpop.permute.xlu0 %837
      %839 = vrot.lane.b32.xlu0 %v818, 8
      %v840 = vpop.permute.xlu0 %839
      %841 = vrot.lane.b32.xlu0 %v819, 8
      %v842 = vpop.permute.xlu0 %841
      %843 = vrot.lane.b32.xlu0 %v820, 8
      %v844 = vpop.permute.xlu0 %843
      %vm853 = vcmask 64512
      %v854 = vsel %vm853, 0.0, %v830
      %v855 = vsel %vm853, 0.0, %v832
      %v856 = vsel %vm853, 0.0, %v834
      %v857 = vsel %vm853, 0.0, %v836
      %v858 = vsel %vm853, 0.0, %v838
      %v859 = vsel %vm853, 0.0, %v840
      %v860 = vsel %vm853, 0.0, %v842
      %v861 = vsel %vm853, 0.0, %v844
      %v862 = vmax.f32 %v813, %v854
      %v863 = vmax.f32 %v814, %v855
      %v864 = vmax.f32 %v815, %v856
      %v865 = vmax.f32 %v816, %v857
      %v866 = vmax.f32 %v817, %v858
      %v867 = vmax.f32 %v818, %v859
      %v868 = vmax.f32 %v819, %v860
      %v869 = vmax.f32 %v820, %v861
      %v870 = vmax.f32 %v685, %v862
      %v871 = vmax.f32 %v686, %v863
      %v872 = vmax.f32 %v687, %v864
      %v873 = vmax.f32 %v688, %v865
      %v874 = vmax.f32 %v689, %v866
      %v875 = vmax.f32 %v690, %v867
      %v876 = vmax.f32 %v691, %v868
      %v877 = vmax.f32 %v692, %v869
      %vm878 = vcmask 523264
      %879 = vst.msk [vmem:[%s197] sm:$0xff] %vm878, %v870
      %880 = vst.msk [vmem:[%s197 + $0x8] sm:$0xff] %vm878, %v871
      %881 = vst.msk [vmem:[%s197 + $0x10] sm:$0xff] %vm878, %v872
      %882 = vst.msk [vmem:[%s197 + $0x18] sm:$0xff] %vm878, %v873
      %883 = vst.msk [vmem:[%s197 + $0x20] sm:$0xff] %vm878, %v874
      %884 = vst.msk [vmem:[%s197 + $0x28] sm:$0xff] %vm878, %v875
      %885 = vst.msk [vmem:[%s197 + $0x30] sm:$0xff] %vm878, %v876
      %886 = vst.msk [vmem:[%s197 + $0x38] sm:$0xff] %vm878, %v877
      %p887 = scmp.lt.s32.totalorder %s15, 1
      %s888 = scalar_select %p887, %s15, 1
      %s889 = smul.addr %s888, 8
      %s890 = smul.addr %s889, 8
      %s891 = scalar_lea.vmem %s4, %s890
      // Predicated region
      $region37: #{modality_specific_forward.1} parent=35 // pred_check
        %p892 = pneg %p122
      $region38: #{modality_specific_forward.1} parent=35 // pred_check_branch
        %894 = sbr.rel (%p892) target = $region40
      $region39: #{modality_specific_forward.1} parent=35 // pred_region
        _
      $region40: #{modality_specific_forward.1} parent=35 // pred_fallthru
        _
    $region36: #{modality_specific_forward.1} parent=5 // pred_fallthru
      _
    %p895 = scmp.le.s32.totalorder 2, %s10
    // Predicated region
    $region41: #{modality_specific_forward.1} parent=5 // pred_check
      %p896 = pneg %p895
    $region42: #{modality_specific_forward.1} parent=5 // pred_check_branch
      %898 = sbr.rel (%p896) target = $region44
    $region43: #{modality_specific_forward.1} parent=5 // pred_region
      %s899 = ssub.s32 %s10, 2
      // Predicated region
      $region45: #{modality_specific_forward.1} parent=43 // pred_check
        %p900 = pneg %p128
      $region46: #{modality_specific_forward.1} parent=43 // pred_check_branch
        %902 = sbr.rel (%p900) target = $region48
      $region47: #{modality_specific_forward.1} parent=43 // pred_region
        %p903 = scmp.lt.s32.totalorder %s16, 1
        %s904 = scalar_select %p903, %s16, 1
        %s905 = smul.addr %s904, 8
        %s906 = smul.addr %s905, 8
        %s907 = scalar_lea.vmem %s4, %s906
      $region48: #{modality_specific_forward.1} parent=43 // pred_fallthru
        _
    $region44: #{modality_specific_forward.1} parent=5 // pred_fallthru
      _
  $region6: #{modality_specific_forward.1} parent=0 // loop_footer
    %s14 = sadd.s32 1, %s10
  $region7: #{modality_specific_forward.1} parent=0 // loop_footer_branch
    %9 = sbr.rel target = $region3
  $region8: #{modality_specific_forward.1} parent=0 // loop_exit
    _

</llo_original>
